<compile_context>
chip_gen: v7x
topology: tpu7x:2x2x1
jax: 0.10.0
libtpu: 0.0.40
codegen_flags: <defaults>
</compile_context>

<pallas_src>
from functools import partial

import jax
import jax.numpy as jnp
from jax.experimental import pallas as pl
from jax.experimental.pallas import tpu as pltpu


# ~4 MiB per (padded) block => x(2 bufs) + out(2 bufs) ~= 16 MiB of VMEM.
_TARGET_BLOCK_BYTES = 4 * 1024 * 1024
# Explicit scoped-VMEM limit: > the 16 MiB v5e default, < v7x's 64 MiB physical.
_VMEM_LIMIT_BYTES = 32 * 1024 * 1024
# Only bother splitting a single-block grid (for v7x megacore) above this size.
_MIN_SPLIT_BYTES = 1 * 1024 * 1024


def _round_up(v, m):
    return ((v + m - 1) // m) * m


def _drop_path_kernel(x_ref, mask_ref, o_ref):
    # out = x * (mask / keep_prob); 1/keep_prob is folded into the f32 mask on
    # the host.  Multiply in f32, single cast on store.
    xf = x_ref[...].astype(jnp.float32)
    o_ref[...] = (xf * mask_ref[...]).astype(o_ref.dtype)


def _choose_tiles(n, f, dtype):
    """Pick (tile_n, tile_f).

    Blocks are either full-extent or (pack, 128)-multiples; divisibility into
    (N, F) is NOT required (partial edge blocks via the cdiv grid).  The VMEM
    budget is computed on the padded tile, so sublane/lane padding is counted.
    """
    itemsize = jnp.dtype(dtype).itemsize
    pack = max(8, 32 // itemsize)        # sublane pack: 8 f32, 16 bf16, 32 int8

    pad_n_full = _round_up(n, pack)
    pad_f_full = _round_up(f, 128)
    row_bytes = pad_f_full * itemsize    # one padded full-width row

    if row_bytes * pack <= _TARGET_BLOCK_BYTES:
        # Full rows fit the budget: tile along N only -> contiguous HBM DMAs
        # and maximally lane-dense output stores.
        tile_f = f
        rows = _TARGET_BLOCK_BYTES // row_bytes
        tile_n = max(pack, (rows // pack) * pack)
        if tile_n >= pad_n_full:
            tile_n = n                   # full extent (always legal)
    else:
        # Row too wide: minimal sublane tile, fat lane-dense feature tile.
        tile_n = min(n, pack)            # padded to `pack` in VMEM -> budgeted
        lanes = _TARGET_BLOCK_BYTES // (pack * itemsize)
        tile_f = max(128, (lanes // 128) * 128)
        if tile_f >= f:
            tile_f = f

    if f < 128:
        tile_f = f                       # lane dim < 128: only full extent legal

    # v7x megacore: avoid a (1, 1) grid for non-trivial arrays so both
    # TensorCores get work (only worth it above ~1 MiB).
    padded_bytes = pad_n_full * pad_f_full * itemsize
    if (pl.cdiv(n, tile_n) == 1 and pl.cdiv(f, tile_f) == 1
            and padded_bytes >= _MIN_SPLIT_BYTES):
        if n > pack:
            tile_n = max(pack, _round_up(-(-n // 2), pack))
        elif f >= 256:
            tile_f = max(128, _round_up(-(-f // 2), 128))

    return tile_n, tile_f


@partial(jax.jit, static_argnames=("drop_prob",))
def _drop_path_train(x, key, drop_prob):
    n, c, h, w = x.shape
    f = c * h * w
    keep_prob = 1.0 - drop_prob
    itemsize = jnp.dtype(x.dtype).itemsize

    # Per-sample Bernoulli(keep_prob) mask; fold 1/keep_prob in.  Kept in f32
    # (it's only (N, 1)) so bf16/fp16 inputs see no extra rounding of the scale.
    mask = jax.random.bernoulli(key, p=keep_prob, shape=(n, 1))
    scaled_mask = mask.astype(jnp.float32) * jnp.float32(1.0 / keep_prob)

    x2 = x.reshape(n, f)                 # bitcast reshape under jit (free)
    tile_n, tile_f = _choose_tiles(n, f, x.dtype)
    grid = (pl.cdiv(n, tile_n), pl.cdiv(f, tile_f))

    out = pl.pallas_call(
        _drop_path_kernel,
        out_shape=jax.ShapeDtypeStruct((n, f), x.dtype),
        grid_spec=pltpu.PrefetchScalarGridSpec(
            num_scalar_prefetch=0,
            grid=grid,
            in_specs=[
                # x: one (tile_n, tile_f) block per grid point.
                pl.BlockSpec((tile_n, tile_f), lambda i, j: (i, j)),
                # mask: block index constant along j -> stays resident in VMEM
                # across the feature axis (no re-DMA per feature tile).
                pl.BlockSpec((tile_n, 1), lambda i, j: (i, 0)),
            ],
            out_specs=pl.BlockSpec((tile_n, tile_f), lambda i, j: (i, j)),
        ),
        compiler_params=pltpu.CompilerParams(
            dimension_semantics=("parallel", "parallel"),
            vmem_limit_bytes=_VMEM_LIMIT_BYTES,
        ),
        cost_estimate=pl.CostEstimate(
            flops=n * f,
            transcendentals=0,
            bytes_accessed=2 * n * f * itemsize + n * 4,
        ),
        # No input_output_aliases: without caller-side donation XLA would add
        # a full defensive copy of x (~1.5x HBM traffic).  Callers that donate
        # x (jax.jit donate_argnums) may re-add {0: 0} for true in-place.
    )(x2, scaled_mask)

    return out.reshape(n, c, h, w)


def drop_path_pallas(x, drop_prob, training, key):
    """JAX/Pallas equivalent of drop_path_(x, drop_prob, training)."""
    if (not training) or drop_prob <= 0.0:
        return x  # identity path, exactly like the reference
    return _drop_path_train(x, key, drop_prob=float(drop_prob))


class DropPathPallas:
    """Mirror of DropPath_ (p = drop probability)."""

    def __init__(self, p=0.0):
        self.p = p
        self.training = True

    def __call__(self, x, key):
        return drop_path_pallas(x, self.p, self.training, key)


def _reference(x, p, key):
    keep_prob = 1.0 - p
    m = jax.random.bernoulli(key, p=keep_prob, shape=(x.shape[0], 1))
    m = m.astype(jnp.float32).reshape(x.shape[0], 1, 1, 1)
    return ((x.astype(jnp.float32) / keep_prob) * m).astype(x.dtype)


if __name__ == "__main__":
    root = jax.random.PRNGKey(0)
    k_x, k_mask, k_x2, k_mask2 = jax.random.split(root, 4)

    # --- small shape matching the module's usual NCHW activations ---
    N, C, H, W = 2, 4, 16, 16
    x = jax.random.normal(k_x, (N, C, H, W), dtype=jnp.float32)

    p = 0.5
    module = DropPathPallas(p=p)
    module.training = True

    ref = _reference(x, p, k_mask)
    out = jax.block_until_ready(module(x, k_mask))

    assert out.shape == x.shape and out.dtype == x.dtype
    assert jnp.allclose(out, ref, atol=1e-6, rtol=1e-6)

    # Eval mode / p == 0 must be exact identity (matches drop_path_).
    module.training = False
    out_eval = jax.block_until_ready(module(x, k_mask))
    assert jnp.array_equal(out_eval, x)
    module.training = True

    # --- larger shape that exercises a genuine multi-block grid ---
    N2, C2, H2, W2 = 64, 32, 32, 32       # F = 32768 -> full-row tiles, grid (2, 1)
    x_big = jax.random.normal(k_x2, (N2, C2, H2, W2), dtype=jnp.float32)
    ref_big = _reference(x_big, p, k_mask2)
    out_big = jax.block_until_ready(module(x_big, k_mask2))
    assert out_big.shape == x_big.shape and out_big.dtype == x_big.dtype
    assert jnp.allclose(out_big, ref_big, atol=1e-6, rtol=1e-6)

    # --- awkward shape: N and F not multiples of (8, 128) -> partial blocks ---
    N3, C3, H3, W3 = 10, 3, 17, 19        # F = 969
    x_odd = jax.random.normal(k_x, (N3, C3, H3, W3), dtype=jnp.float32)
    ref_odd = _reference(x_odd, p, k_mask2)
    out_odd = jax.block_until_ready(module(x_odd, k_mask2))
    assert out_odd.shape == x_odd.shape and out_odd.dtype == x_odd.dtype
    assert jnp.allclose(out_odd, ref_odd, atol=1e-6, rtol=1e-6)

    print("KERNEL_OK")
</pallas_src>

<mosaic_0001>
module attributes {stable_mosaic.version = 11 : i64} {
  func.func @_drop_path_kernel(%arg0: i32, %arg1: i32, %arg2: memref<2x1024xf32, #tpu.memory_space<vmem>>, %arg3: memref<2x1xf32, #tpu.memory_space<vmem>>, %arg4: memref<2x1024xf32, #tpu.memory_space<vmem>>) attributes {dimension_semantics = [#tpu.dimension_semantics<parallel>, #tpu.dimension_semantics<parallel>], iteration_bounds = array<i64: 1, 1>, scalar_prefetch = 0 : i64, scratch_operands = 0 : i64, tpu.core_type = #tpu.core_type<tc>, window_params = [{transform_indices = @transform_0, window_bounds = array<i64: 2, 1024>}, {transform_indices = @transform_1, window_bounds = array<i64: 2, 1>}, {transform_indices = @transform_2, window_bounds = array<i64: 2, 1024>}]} {
    %c0 = arith.constant 0 : index
    %c0_0 = arith.constant 0 : index
    %0 = vector.load %arg2[%c0, %c0_0] : memref<2x1024xf32, #tpu.memory_space<vmem>>, vector<2x1024xf32>
    %c0_1 = arith.constant 0 : index
    %c0_2 = arith.constant 0 : index
    %1 = vector.load %arg3[%c0_1, %c0_2] : memref<2x1xf32, #tpu.memory_space<vmem>>, vector<2x1xf32>
    %2 = vector.broadcast %1 : vector<2x1xf32> to vector<2x1024xf32>
    %3 = arith.mulf %0, %2 : vector<2x1024xf32>
    %c0_3 = arith.constant 0 : index
    %c0_4 = arith.constant 0 : index
    %4 = vector.load %arg4[%c0_3, %c0_4] : memref<2x1024xf32, #tpu.memory_space<vmem>>, vector<2x1024xf32>
    tpu.vector_store %arg4[%c0_3, %c0_4], %3 {strides = array<i32>} : memref<2x1024xf32, #tpu.memory_space<vmem>>, vector<2x1024xf32>,
    return
  }
  func.func @transform_0(%arg0: i32, %arg1: i32) -> (i32, i32) {
    %c0_i32 = arith.constant 0 : i32
    return %arg0, %arg1 : i32, i32
  }
  func.func @transform_1(%arg0: i32, %arg1: i32) -> (i32, i32) {
    %c0_i32 = arith.constant 0 : i32
    %c0_i32_0 = arith.constant 0 : i32
    return %arg0, %c0_i32 : i32, i32
  }
  func.func @transform_2(%arg0: i32, %arg1: i32) -> (i32, i32) {
    %c0_i32 = arith.constant 0 : i32
    return %arg0, %arg1 : i32, i32
  }
}

</mosaic_0001>

<llo_original>
// kernel: _drop_path_train.1
$region0: #{_drop_path_train.1}
  #allocation0 [shape = 'u32[]', space=smem, size = 0x4, offset = 0x4, fixed_abs, tag = 'smem constant byte address 0x4 - core index']
  #allocation1 [shape = 'u32[144,128]{1,0:T(1,128)}', space=vmem, size = 0x12000, scoped, tag = 'internal scratch']
  %s0 = inlined_call_operand.vmem [shape: f32[2,1024], index: 0, kind: input, shape index: {}]
  %s1 = inlined_call_operand.vmem [shape: f32[2,1], index: 1, kind: input, shape index: {}]
  %s2 = inlined_call_operand.vmem [shape: f32[2,1024], index: 2, kind: output, shape index: {}]
  %s3 = sld [smem:[#allocation0]]
  $region18: #{_drop_path_train.1} parent=0
    _
  %s5 = ssub.s32 1, %s3
  %s6 = scalar_select 0, %s5, %s3
  // Predicated region
  $region2: #{_drop_path_train.1} parent=0 // pred_check
    _
  $region3: #{_drop_path_train.1} parent=0 // pred_check_branch
    %8 = sbr.rel (0) target = $region5
  $region4: #{_drop_path_train.1} parent=0 // pred_region
    _
  $region5: #{_drop_path_train.1} parent=0 // pred_fallthru
    _
  // Predicated region
  $region6: #{_drop_path_train.1} parent=0 // pred_check
    _
  $region7: #{_drop_path_train.1} parent=0 // pred_check_branch
    %10 = sbr.rel (0) target = $region9
  $region8: #{_drop_path_train.1} parent=0 // pred_region
    _
  $region9: #{_drop_path_train.1} parent=0 // pred_fallthru
    _
  %v11 = vld [vmem:[%s0] sm:$0xff]
  %v12 = vld [vmem:[%s0 + $0x8] sm:$0xff]
  %v13 = vld [vmem:[%s1] sm:$0x3]
  %15 = vset.pattern.permute.xlu0 0
  %16 = vperm.xlu0 %15, %v13
  %v17 = vpop.permute.xlu0 %16
  %v19 = vunpack.c.l.s4 269488144
  %v20 = vunpack.c.0.s8 %v19
  %v21 = vlaneseq
  %v22 = vshrl.u32 %v21, 7
  %v23 = vsub.s32 %v20, %v22
  %v24 = vrot.slane %v17, %v23
  %v26 = vmul.f32 %v11, %v24
  %v27 = vmul.f32 %v12, %v24
  %28 = vst [vmem:[%s2] sm:$0xff] %v26
  %29 = vst [vmem:[%s2 + $0x8] sm:$0xff] %v27
  // Predicated region
  $region10: #{_drop_path_train.1} parent=0 // pred_check
    _
  $region11: #{_drop_path_train.1} parent=0 // pred_check_branch
    %31 = sbr.rel (0) target = $region13
  $region12: #{_drop_path_train.1} parent=0 // pred_region
    _
  $region13: #{_drop_path_train.1} parent=0 // pred_fallthru
    _
  // Predicated region
  $region14: #{_drop_path_train.1} parent=0 // pred_check
    _
  $region15: #{_drop_path_train.1} parent=0 // pred_check_branch
    %33 = sbr.rel (0) target = $region17
  $region16: #{_drop_path_train.1} parent=0 // pred_region
    _
  $region17: #{_drop_path_train.1} parent=0 // pred_fallthru
    _

</llo_original>
